<compile_context>
chip_gen: v6e
topology: v6e:2x2x1
jax: 0.10.0
libtpu: 0.0.40
codegen_flags: <defaults>
</compile_context>

<pallas_src>
import numpy as np
import jax
import jax.numpy as jnp
from jax.experimental import pallas as pl
from jax.experimental.pallas import tpu as pltpu

CPAD = 16  # channel padding: full bf16 sublane packing (16 rows / packed vreg)

try:  # v7x: 64 MiB VMEM / TC vs 128 MiB on v5e/v6e -> derive the scoped limit per generation
    VMEM_LIMIT = min(int(pltpu.get_tpu_info().vmem_capacity_bytes * 3 // 4),
                     64 * 1024 * 1024)
except Exception:  # pragma: no cover - fallback if the query is unavailable
    VMEM_LIMIT = 32 * 1024 * 1024


def _cparams():
    return pltpu.CompilerParams(dimension_semantics=("parallel",),
                                vmem_limit_bytes=VMEM_LIMIT)


def _rup(x, m):
    return ((x + m - 1) // m) * m


# ----------------------------------------------------------------------------
# Host-side layout helpers (PF = zero-bordered padded-flat, lane-dense)
# ----------------------------------------------------------------------------
def pf_width(H, W):
    return _rup((H + 2) * (W + 2) + 2, 128)


def to_pf(x_nchw, c_pad, p2l):
    """NCHW -> bf16 PF slab (B, c_pad, p2l) with zero channel/space padding."""
    B, C, H, W = x_nchw.shape
    xp = jnp.pad(x_nchw, ((0, 0), (0, c_pad - C), (1, 1), (1, 1)))
    flat = xp.reshape(B, c_pad, (H + 2) * (W + 2))
    flat = jnp.pad(flat, ((0, 0), (0, 0), (0, p2l - flat.shape[-1])))
    return flat.astype(jnp.bfloat16)


def make_pf_mask(H, W, p2l):
    """(1, p2l) f32 mask: 1.0 at interior pixels of the PF layout, 0.0 elsewhere."""
    Hp, Wp = H + 2, W + 2
    m = np.zeros((Hp, Wp), np.float32)
    m[1:H + 1, 1:W + 1] = 1.0
    m = np.concatenate([m.reshape(-1), np.zeros(p2l - Hp * Wp, np.float32)])
    return jnp.asarray(m.reshape(1, -1))


def fold3x3(w, scale, coutp, cinp):
    """Fold per-out-channel BN scale into a 3x3 conv weight, zero-pad channels,
    flatten tap-major to (coutp, 9*cinp) bf16 (matches the in-kernel tap stacking)."""
    cout, kh, kw, cin = w.shape
    wf = w * scale.reshape(-1, 1, 1, 1)
    wp = jnp.zeros((coutp, kh, kw, cinp), jnp.float32).at[:cout, :, :, :cin].set(wf)
    return wp.reshape(coutp, kh * kw * cinp).astype(jnp.bfloat16)


def fold1x1(w, scale, coutp, cinp):
    cout, _, _, cin = w.shape
    wf = (w * scale.reshape(-1, 1, 1, 1)).reshape(cout, cin)
    return (jnp.zeros((coutp, cinp), jnp.float32).at[:cout, :cin].set(wf)
            .astype(jnp.bfloat16))


def pad_vec(v, cp):
    v = jnp.asarray(v).reshape(-1)
    return jnp.zeros((cp, 1), jnp.float32).at[:v.shape[0], 0].set(v)


def polyphase_to_pf(y4, c, H1, W1, p2l):
    """Phase-major ConvTranspose output (B, 4*c, H1*W1) -> zero-bordered bf16 PF slab
    (B, c, p2l) at resolution (2H1, 2W1).  Pure relayout; XLA fuses it into one copy."""
    B = y4.shape[0]
    y6 = y4.reshape(B, 2, 2, c, H1, W1)                                # (b, ki, kj, c, i, j)
    yp = jnp.pad(y6, ((0, 0), (0, 0), (0, 0), (0, 0), (1, 1), (1, 1)))
    rows = []
    for ri in (0, 1):
        cols = [yp[:, 1 - ri, 1 - rj, :, ri:ri + H1 + 1, rj:rj + W1 + 1]
                for rj in (0, 1)]
        rows.append(jnp.stack(cols, axis=-1))                          # (B, c, H1+1, W1+1, 2)
    pf = jnp.stack(rows, axis=3)                                       # (B, c, H1+1, 2, W1+1, 2)
    pf = pf.reshape(B, c, (2 * H1 + 2) * (2 * W1 + 2))
    return jnp.pad(pf, ((0, 0), (0, 0), (0, p2l - pf.shape[-1])))


# ----------------------------------------------------------------------------
# Kernel 1: ConvTranspose2d(k=2, s=2) as a per-pixel matmul (bias only), bf16 in/out
# ----------------------------------------------------------------------------
def _matmul_bias_kernel(x_ref, w_ref, b_ref, o_ref):
    y = (jnp.dot(w_ref[...], x_ref[0], preferred_element_type=jnp.float32)
         + b_ref[...])
    o_ref[0] = y.astype(o_ref.dtype)


def matmul_bias(x, w, b):
    """x: (B, Cin, L) bf16; w: (Cout, Cin) bf16; b: (Cout, 1) f32 -> (B, Cout, L) bf16."""
    B, cin, L = x.shape
    cout = w.shape[0]
    return pl.pallas_call(
        _matmul_bias_kernel,
        out_shape=jax.ShapeDtypeStruct((B, cout, L), jnp.bfloat16),
        grid=(B,),
        in_specs=[pl.BlockSpec((1, cin, L), lambda b_: (b_, 0, 0)),
                  pl.BlockSpec((cout, cin), lambda b_: (0, 0)),
                  pl.BlockSpec((cout, 1), lambda b_: (0, 0))],
        out_specs=pl.BlockSpec((1, cout, L), lambda b_: (b_, 0, 0)),
        compiler_params=_cparams(),
    )(x, w, b)


# ----------------------------------------------------------------------------
# Kernel 2: DoubleConv = (3x3 conv -> BN(folded) -> ReLU) x 2, fused, PF in -> PF out
#           each 3x3 conv is ONE stacked MXU dot with K = 9*Cin.
# ----------------------------------------------------------------------------
def _make_double_conv_pf_kernel(H, W, p2l):
    Wp = W + 2
    HWp = H * Wp

    def kernel(x_ref, mask_ref, w1_ref, t1_ref, w2_ref, t2_ref, o_ref,
               h_s, st1_s, st2_s):
        cin = st1_s.shape[0] // 9
        cmid = h_s.shape[0]
        cout = o_ref.shape[1]
        mask_w = mask_ref[:, Wp + 1:Wp + 1 + HWp]          # (1, HWp) valid-column mask

        # conv1: stack 9 shifted contiguous tap slices -> one K=9*cin MXU dot
        for t in range(9):
            di, dj = divmod(t, 3)
            off = di * Wp + dj
            st1_s[t * cin:(t + 1) * cin, :] = x_ref[0, :, off:off + HWp]
        y1 = jnp.dot(w1_ref[...], st1_s[...], preferred_element_type=jnp.float32)
        y1 = jnp.maximum(y1 + t1_ref[...], 0.0) * mask_w

        # keep the intermediate as a zero-bordered PF slab in VMEM; only the thin
        # border strips are zeroed (interior window is fully rewritten each step).
        h_s[:, :Wp + 1] = jnp.zeros((cmid, Wp + 1), h_s.dtype)
        h_s[:, Wp + 1 + HWp:] = jnp.zeros((cmid, p2l - (Wp + 1 + HWp)), h_s.dtype)
        h_s[:, Wp + 1:Wp + 1 + HWp] = y1.astype(h_s.dtype)

        # conv2: same stacked-dot trick on the VMEM intermediate
        for t in range(9):
            di, dj = divmod(t, 3)
            off = di * Wp + dj
            st2_s[t * cmid:(t + 1) * cmid, :] = h_s[:, off:off + HWp]
        y2 = jnp.dot(w2_ref[...], st2_s[...], preferred_element_type=jnp.float32)
        y2 = jnp.maximum(y2 + t2_ref[...], 0.0) * mask_w

        # zero only the PF border strips of the output; write the interior once
        o_ref[0, :, :Wp + 1] = jnp.zeros((cout, Wp + 1), o_ref.dtype)
        o_ref[0, :, Wp + 1 + HWp:] = jnp.zeros((cout, p2l - (Wp + 1 + HWp)), o_ref.dtype)
        o_ref[0, :, Wp + 1:Wp + 1 + HWp] = y2.astype(o_ref.dtype)

    return kernel


def double_conv_pf(x_pf, w1, t1, w2, t2, mask, H, W, p2l):
    B, cin, _ = x_pf.shape
    cmid = w1.shape[0]
    cout = w2.shape[0]
    HWp = H * (W + 2)
    # NOTE: stacking scratch is 9*C*HWp*2B; for large decoder stages switch to row-grouped
    # stacking (3 dots of K=3*C) if this would blow the per-call VMEM budget.
    return pl.pallas_call(
        _make_double_conv_pf_kernel(H, W, p2l),
        out_shape=jax.ShapeDtypeStruct((B, cout, p2l), jnp.bfloat16),
        grid=(B,),
        in_specs=[
            pl.BlockSpec((1, cin, p2l), lambda b: (b, 0, 0)),
            pl.BlockSpec((1, p2l), lambda b: (0, 0)),
            pl.BlockSpec((cmid, 9 * cin), lambda b: (0, 0)),
            pl.BlockSpec((cmid, 1), lambda b: (0, 0)),
            pl.BlockSpec((cout, 9 * cmid), lambda b: (0, 0)),
            pl.BlockSpec((cout, 1), lambda b: (0, 0)),
        ],
        out_specs=pl.BlockSpec((1, cout, p2l), lambda b: (b, 0, 0)),
        scratch_shapes=[pltpu.VMEM((cmid, p2l), jnp.bfloat16),       # PF intermediate
                        pltpu.VMEM((9 * cin, HWp), jnp.bfloat16),    # stacked taps conv1
                        pltpu.VMEM((9 * cmid, HWp), jnp.bfloat16)],  # stacked taps conv2
        compiler_params=_cparams(),
    )(x_pf, mask, w1, t1, w2, t2)


# ----------------------------------------------------------------------------
# Kernel 3: FusionBlock, fully fused
#   (optional 1x1 input projections) -> fu0 1x1 conv (split weights, no concat)
#   -> fu1 3x3 conv (one stacked dot) -> sigmoid -> global mean -> blend
# ----------------------------------------------------------------------------
def _make_fusion_pf_kernel(H, W, project):
    Wp = W + 2
    HWp = H * Wp
    inv_hw = 1.0 / (H * W)

    def kernel(*args):
        if project:
            (f1_ref, f2_ref, mask_ref, p1w_ref, p1t_ref, p2w_ref, p2t_ref,
             w0a_ref, w0b_ref, t0_ref, w1_ref, b1_ref,
             o_ref, w0_s, st_s) = args
        else:
            (f1_ref, f2_ref, mask_ref, w0a_ref, w0b_ref, t0_ref,
             w1_ref, b1_ref, o_ref, w0_s, st_s) = args

        mask_pf = mask_ref[...]                          # (1, p2l)
        mask_w = mask_ref[:, Wp + 1:Wp + 1 + HWp]        # (1, HWp)
        cm = w0a_ref.shape[0]

        if project:
            # input1 / input2: ConvBnReLU 1x1 (only the interior is consumed unmasked)
            f1v = jnp.maximum(
                jnp.dot(p1w_ref[...], f1_ref[0], preferred_element_type=jnp.float32)
                + p1t_ref[...], 0.0).astype(jnp.bfloat16)
            f2v = jnp.maximum(
                jnp.dot(p2w_ref[...], f2_ref[0], preferred_element_type=jnp.float32)
                + p2t_ref[...], 0.0).astype(jnp.bfloat16)
        else:
            f1v = f1_ref[0]
            f2v = f2_ref[0]
        f1w = f1v[:, Wp + 1:Wp + 1 + HWp]
        f2w = f2v[:, Wp + 1:Wp + 1 + HWp]

        # fu0: 1x1 ConvBnReLU on cat(f1, f2) without materializing the concat;
        # mask to zero outside the interior so fu1 sees correct zero padding.
        w0 = (jnp.dot(w0a_ref[...], f1v, preferred_element_type=jnp.float32)
              + jnp.dot(w0b_ref[...], f2v, preferred_element_type=jnp.float32)
              + t0_ref[...])
        w0_s[...] = (jnp.maximum(w0, 0.0) * mask_pf).astype(w0_s.dtype)

        # fu1: 3x3 conv as ONE stacked MXU dot (K = 9*cm) on 9 shifted slices of the PF map
        for t in range(9):
            di, dj = divmod(t, 3)
            off = di * Wp + dj
            st_s[t * cm:(t + 1) * cm, :] = w0_s[:, off:off + HWp]
        acc = jnp.dot(w1_ref[...], st_s[...], preferred_element_type=jnp.float32)

        # sigmoid -> global average pool; the sigmoid map never leaves VMEM
        s = jax.nn.sigmoid(acc + b1_ref[...]) * mask_w
        wbar = jnp.sum(s, axis=-1, keepdims=True) * inv_hw            # (cm, 1)

        # blend in "wide" layout (H rows of Wp lanes; seam lanes masked to 0)
        m = ((1.0 - wbar) * f1w.astype(jnp.float32)
             + wbar * f2w.astype(jnp.float32)) * mask_w
        o_ref[0] = m.astype(o_ref.dtype)

    return kernel


def fusion_block_pf(f1_pf, f2_pf, mask, wts, H, W, p2l, cm, project):
    B, c1p, _ = f1_pf.shape
    c2p = f2_pf.shape[1]
    Wp = W + 2
    HWp = H * Wp

    operands = [f1_pf, f2_pf, mask]
    in_specs = [pl.BlockSpec((1, c1p, p2l), lambda b: (b, 0, 0)),
                pl.BlockSpec((1, c2p, p2l), lambda b: (b, 0, 0)),
                pl.BlockSpec((1, p2l), lambda b: (0, 0))]
    if project:
        operands += [wts["p1w"], wts["p1t"], wts["p2w"], wts["p2t"]]
        in_specs += [pl.BlockSpec((cm, c1p), lambda b: (0, 0)),
                     pl.BlockSpec((cm, 1), lambda b: (0, 0)),
                     pl.BlockSpec((cm, c2p), lambda b: (0, 0)),
                     pl.BlockSpec((cm, 1), lambda b: (0, 0))]
    operands += [wts["w0a"], wts["w0b"], wts["t0"], wts["w1"], wts["b1"]]
    in_specs += [pl.BlockSpec((cm, cm), lambda b: (0, 0)),
                 pl.BlockSpec((cm, cm), lambda b: (0, 0)),
                 pl.BlockSpec((cm, 1), lambda b: (0, 0)),
                 pl.BlockSpec((cm, 9 * cm), lambda b: (0, 0)),
                 pl.BlockSpec((cm, 1), lambda b: (0, 0))]

    scratch = [pltpu.VMEM((cm, p2l), jnp.bfloat16),      # fu0 output (PF, masked)
               pltpu.VMEM((9 * cm, HWp), jnp.bfloat16)]  # stacked taps for fu1

    m_wide = pl.pallas_call(
        _make_fusion_pf_kernel(H, W, project),
        out_shape=jax.ShapeDtypeStruct((B, cm, HWp), jnp.float32),
        grid=(B,),
        in_specs=in_specs,
        out_specs=pl.BlockSpec((1, cm, HWp), lambda b: (b, 0, 0)),
        scratch_shapes=scratch,
        compiler_params=_cparams(),
    )(*operands)
    return m_wide.reshape(B, cm, H, Wp)[:, :, :, :W]


# ----------------------------------------------------------------------------
# `Up` forward
# ----------------------------------------------------------------------------
def up_forward(p, x1, x2):
    B, C1, H1, W1 = x1.shape
    C2 = x2.shape[1]
    out_ch = p["fu0_w"].shape[0]
    c1p = _rup(C1, CPAD)
    c2p = _rup(C2, CPAD)
    cmp_ = _rup(out_ch, CPAD)

    if x1.shape[2] != x2.shape[2]:
        # up[0]: ConvTranspose2d(in_ch, in_ch//2, 2, 2) as a per-pixel matmul on the MXU
        mid = p["ct_w"].shape[2]                         # ct_w: (ki, kj, Cout, Cin)
        midp = _rup(mid, CPAD)
        wt = (jnp.zeros((2, 2, midp, c1p), jnp.float32)
              .at[:, :, :mid, :C1].set(p["ct_w"])
              .reshape(4 * midp, c1p).astype(jnp.bfloat16))
        b4 = jnp.tile(jnp.zeros((midp,), jnp.float32).at[:mid].set(p["ct_b"]),
                      4).reshape(4 * midp, 1)
        x1p = (jnp.pad(x1, ((0, 0), (0, c1p - C1), (0, 0), (0, 0)))
               .reshape(B, c1p, H1 * W1).astype(jnp.bfloat16))
        y4 = matmul_bias(x1p, wt, b4)                    # (B, 4*midp, H1*W1) bf16, phase-major

        H, W = 2 * H1, 2 * W1
        p2l = pf_width(H, W)
        mask = make_pf_mask(H, W, p2l)
        # TODO(synk): fully fusing this polyphase->PF relayout into the DoubleConv kernel
        #             needs an in-kernel lane interleave; here it is one XLA pad/stack/reshape.
        y_pf = polyphase_to_pf(y4, midp, H1, W1, p2l)
        # up[1]: DoubleConv fused into one kernel, BN scale folded into bf16 weights
        f1_pf = double_conv_pf(
            y_pf,
            fold3x3(p["dc1_w"], p["dc1_s"], cmp_, midp), pad_vec(p["dc1_t"], cmp_),
            fold3x3(p["dc2_w"], p["dc2_s"], cmp_, cmp_), pad_vec(p["dc2_t"], cmp_),
            mask, H, W, p2l)
        f1_c = out_ch
    else:
        H, W = H1, W1
        p2l = pf_width(H, W)
        mask = make_pf_mask(H, W, p2l)
        f1_pf = to_pf(x1, c1p, p2l)
        f1_c = C1

    f2_pf = to_pf(x2, c2p, p2l)
    project = (f1_c != C2)

    w0 = (p["fu0_w"] * p["fu0_s"].reshape(-1, 1, 1, 1)).reshape(out_ch, 2 * out_ch)
    wts = {
        "w0a": (jnp.zeros((cmp_, cmp_), jnp.float32)
                .at[:out_ch, :out_ch].set(w0[:, :out_ch]).astype(jnp.bfloat16)),
        "w0b": (jnp.zeros((cmp_, cmp_), jnp.float32)
                .at[:out_ch, :out_ch].set(w0[:, out_ch:]).astype(jnp.bfloat16)),
        "t0": pad_vec(p["fu0_t"], cmp_),
        "w1": fold3x3(p["fu1_w"], jnp.ones((out_ch,), jnp.float32), cmp_, cmp_),
        "b1": pad_vec(p["fu1_b"], cmp_),
    }
    if project:
        wts.update({
            "p1w": fold1x1(p["in1_w"], p["in1_s"], cmp_, f1_pf.shape[1]),
            "p1t": pad_vec(p["in1_t"], cmp_),
            "p2w": fold1x1(p["in2_w"], p["in2_s"], cmp_, c2p),
            "p2t": pad_vec(p["in2_t"], cmp_),
        })

    m = fusion_block_pf(f1_pf, f2_pf, mask, wts, H, W, p2l, cmp_, project)
    return m[:, :out_ch]


# ----------------------------------------------------------------------------
# Deterministic parameter init (BN folded to scale/shift, inference semantics)
# ----------------------------------------------------------------------------
def init_params(key, in_ch, out_ch):
    mid = in_ch // 2
    ks = jax.random.split(key, 16)

    def w(k, shape, s=0.1):
        return (jax.random.normal(k, shape) * s).astype(jnp.float32)

    def bn(k, c):
        k1, k2, k3, k4 = jax.random.split(k, 4)
        gamma = jax.random.uniform(k1, (c,), minval=0.5, maxval=1.5)
        beta = jax.random.normal(k2, (c,)) * 0.1
        mean = jax.random.normal(k3, (c,)) * 0.1
        var = jax.random.uniform(k4, (c,), minval=0.5, maxval=1.5)
        scale = gamma / jnp.sqrt(var + 1e-5)
        shift = beta - mean * scale
        return (scale.reshape(c, 1).astype(jnp.float32),
                shift.reshape(c, 1).astype(jnp.float32))

    p = {}
    p["ct_w"] = w(ks[0], (2, 2, mid, in_ch))            # ConvTranspose2d(in, in//2, 2, 2)
    p["ct_b"] = w(ks[1], (mid,))
    p["dc1_w"] = w(ks[2], (out_ch, 3, 3, mid))          # DoubleConv
    p["dc1_s"], p["dc1_t"] = bn(ks[3], out_ch)
    p["dc2_w"] = w(ks[4], (out_ch, 3, 3, out_ch))
    p["dc2_s"], p["dc2_t"] = bn(ks[5], out_ch)
    p["in1_w"] = w(ks[6], (out_ch, 1, 1, in_ch))        # FusionBlock(in_ch, out_ch, out_ch)
    p["in1_s"], p["in1_t"] = bn(ks[7], out_ch)
    p["in2_w"] = w(ks[8], (out_ch, 1, 1, out_ch))
    p["in2_s"], p["in2_t"] = bn(ks[9], out_ch)
    p["fu0_w"] = w(ks[10], (out_ch, 1, 1, 2 * out_ch))
    p["fu0_s"], p["fu0_t"] = bn(ks[11], out_ch)
    p["fu1_w"] = w(ks[12], (out_ch, 3, 3, out_ch))
    p["fu1_b"] = w(ks[13], (out_ch,))
    return p


# ----------------------------------------------------------------------------
# Pure-JAX f32 reference (for correctness check)
# ----------------------------------------------------------------------------
def _ref_conv(x, w_ochw_cin_last, padding):
    w_oihw = jnp.transpose(w_ochw_cin_last, (0, 3, 1, 2))
    return jax.lax.conv_general_dilated(
        x, w_oihw, (1, 1), padding, dimension_numbers=("NCHW", "OIHW", "NCHW"))


def up_forward_ref(p, x1, x2):
    def affine(y, s, t):
        return y * s.reshape(1, -1, 1, 1) + t.reshape(1, -1, 1, 1)

    if x1.shape[2] != x2.shape[2]:
        B, C, H, W = x1.shape
        mid = p["ct_w"].shape[2]
        y = jnp.einsum("bcij,kloc->boikjl", x1, p["ct_w"]).reshape(B, mid, 2 * H, 2 * W)
        y = y + p["ct_b"][None, :, None, None]
        y = jnp.maximum(affine(_ref_conv(y, p["dc1_w"], [(1, 1), (1, 1)]),
                               p["dc1_s"], p["dc1_t"]), 0.0)
        y = jnp.maximum(affine(_ref_conv(y, p["dc2_w"], [(1, 1), (1, 1)]),
                               p["dc2_s"], p["dc2_t"]), 0.0)
        x1 = y
    f1, f2 = x1, x2
    if f1.shape[1] != f2.shape[1]:
        f1 = jnp.maximum(affine(_ref_conv(f1, p["in1_w"], [(0, 0), (0, 0)]),
                                p["in1_s"], p["in1_t"]), 0.0)
        f2 = jnp.maximum(affine(_ref_conv(f2, p["in2_w"], [(0, 0), (0, 0)]),
                                p["in2_s"], p["in2_t"]), 0.0)
    wc = jnp.concatenate([f1, f2], axis=1)
    w = jnp.maximum(affine(_ref_conv(wc, p["fu0_w"], [(0, 0), (0, 0)]),
                           p["fu0_s"], p["fu0_t"]), 0.0)
    w = _ref_conv(w, p["fu1_w"], [(1, 1), (1, 1)]) + p["fu1_b"][None, :, None, None]
    w = jax.nn.sigmoid(w)
    w = w.mean(axis=(2, 3))[:, :, None, None]
    return (1.0 - w) * f1 + w * f2


# ----------------------------------------------------------------------------
if __name__ == "__main__":
    in_ch, out_ch = 8, 4
    B, H, W = 2, 8, 8                                   # x1 is the low-res deep feature

    key = jax.random.PRNGKey(0)
    kp, k1, k2, k3 = jax.random.split(key, 4)
    params = init_params(kp, in_ch, out_ch)

    # Path 1: spatial sizes differ -> ConvTranspose + DoubleConv + FusionBlock (no proj.)
    x1 = jax.random.normal(k1, (B, in_ch, H, W), dtype=jnp.float32)           # NCHW
    x2 = jax.random.normal(k2, (B, out_ch, 2 * H, 2 * W), dtype=jnp.float32)  # NCHW skip
    out = jax.block_until_ready(up_forward(params, x1, x2))
    ref = up_forward_ref(params, x1, x2)
    assert out.shape == (B, out_ch, 2 * H, 2 * W), out.shape
    np.testing.assert_allclose(np.asarray(out), np.asarray(ref), rtol=3e-2, atol=3e-2)

    # Path 2: equal spatial size, different channel counts -> input1/input2 projections
    x1b = jax.random.normal(k3, (B, in_ch, 2 * H, 2 * W), dtype=jnp.float32)
    outb = jax.block_until_ready(up_forward(params, x1b, x2))
    refb = up_forward_ref(params, x1b, x2)
    assert outb.shape == (B, out_ch, 2 * H, 2 * W), outb.shape
    np.testing.assert_allclose(np.asarray(outb), np.asarray(refb), rtol=3e-2, atol=3e-2)

    print("KERNEL_OK")
</pallas_src>

<mosaic_0001>
module attributes {stable_mosaic.version = 11 : i64} {
  func.func @_matmul_bias_kernel(%arg0: i32, %arg1: memref<1x16x64xbf16, #tpu.memory_space<vmem>>, %arg2: memref<64x16xbf16, #tpu.memory_space<vmem>>, %arg3: memref<64x1xf32, #tpu.memory_space<vmem>>, %arg4: memref<1x64x64xbf16, #tpu.memory_space<vmem>>) attributes {dimension_semantics = [#tpu.dimension_semantics<parallel>], iteration_bounds = array<i64: 2>, scalar_prefetch = 0 : i64, scratch_operands = 0 : i64, tpu.core_type = #tpu.core_type<tc>, window_params = [{transform_indices = @transform_0, window_bounds = array<i64: 1, 16, 64>}, {pipeline_mode = #tpu.pipeline_mode<synchronous>, transform_indices = @transform_1, window_bounds = array<i64: 64, 16>}, {pipeline_mode = #tpu.pipeline_mode<synchronous>, transform_indices = @transform_2, window_bounds = array<i64: 64, 1>}, {transform_indices = @transform_3, window_bounds = array<i64: 1, 64, 64>}]} {
    %c0 = arith.constant 0 : index
    %c0_0 = arith.constant 0 : index
    %0 = vector.load %arg2[%c0, %c0_0] : memref<64x16xbf16, #tpu.memory_space<vmem>>, vector<64x16xbf16>
    %c0_1 = arith.constant 0 : index
    %c0_2 = arith.constant 0 : index
    %c0_3 = arith.constant 0 : index
    %1 = vector.load %arg1[%c0_1, %c0_2, %c0_3] : memref<1x16x64xbf16, #tpu.memory_space<vmem>>, vector<1x16x64xbf16>
    %2 = vector.shape_cast %1 : vector<1x16x64xbf16> to vector<16x64xbf16>
    %cst = arith.constant dense<0.000000e+00> : vector<64x64xf32>
    %3 = tpu.matmul %0, %2, %cst {dimension_numbers = #tpu.dot_dimension_numbers<[1], [0], [0], [1], [0, 0, 1, 1], [], []>} : vector<64x16xbf16>, vector<16x64xbf16>, vector<64x64xf32> -> vector<64x64xf32>
    %c0_4 = arith.constant 0 : index
    %c0_5 = arith.constant 0 : index
    %4 = vector.load %arg3[%c0_4, %c0_5] : memref<64x1xf32, #tpu.memory_space<vmem>>, vector<64x1xf32>
    %5 = vector.broadcast %4 : vector<64x1xf32> to vector<64x64xf32>
    %6 = arith.addf %3, %5 : vector<64x64xf32>
    %7 = arith.truncf %6 : vector<64x64xf32> to vector<64x64xbf16>
    %c0_6 = arith.constant 0 : index
    %c0_7 = arith.constant 0 : index
    %c0_8 = arith.constant 0 : index
    %8 = vector.load %arg4[%c0_6, %c0_7, %c0_8] : memref<1x64x64xbf16, #tpu.memory_space<vmem>>, vector<1x64x64xbf16>
    %9 = vector.shape_cast %8 : vector<1x64x64xbf16> to vector<64x64xbf16>
    %10 = vector.shape_cast %7 : vector<64x64xbf16> to vector<1x64x64xbf16>
    tpu.vector_store %arg4[%c0_6, %c0_7, %c0_8], %10 {strides = array<i32>} : memref<1x64x64xbf16, #tpu.memory_space<vmem>>, vector<1x64x64xbf16>,
    return
  }
  func.func @transform_0(%arg0: i32) -> (i32, i32, i32) {
    %c0_i32 = arith.constant 0 : i32
    %c0_i32_0 = arith.constant 0 : i32
    %c0_i32_1 = arith.constant 0 : i32
    return %arg0, %c0_i32, %c0_i32_0 : i32, i32, i32
  }
  func.func @transform_1(%arg0: i32) -> (i32, i32) {
    %c0_i32 = arith.constant 0 : i32
    %c0_i32_0 = arith.constant 0 : i32
    %c0_i32_1 = arith.constant 0 : i32
    return %c0_i32, %c0_i32_0 : i32, i32
  }
  func.func @transform_2(%arg0: i32) -> (i32, i32) {
    %c0_i32 = arith.constant 0 : i32
    %c0_i32_0 = arith.constant 0 : i32
    %c0_i32_1 = arith.constant 0 : i32
    return %c0_i32, %c0_i32_0 : i32, i32
  }
  func.func @transform_3(%arg0: i32) -> (i32, i32, i32) {
    %c0_i32 = arith.constant 0 : i32
    %c0_i32_0 = arith.constant 0 : i32
    %c0_i32_1 = arith.constant 0 : i32
    return %arg0, %c0_i32, %c0_i32_0 : i32, i32, i32
  }
}

</mosaic_0001>

<llo_original>
// kernel: tpu_custom_call.1
$region0: #{tpu_custom_call.1}
  #allocation0 [shape = 'u32[]', space=smem, size = 0x4, offset = 0x4, fixed_abs, tag = 'smem constant byte address 0x4 - core index']
  #allocation1 [shape = 'u32[144,128]{1,0:T(1,128)}', space=vmem, size = 0x12000, scoped, tag = 'internal scratch']
  %s0 = inlined_call_operand.vmem [shape: bf16[2,16,64], index: 0, kind: input, shape index: {}]
  %s1 = inlined_call_operand.vmem [shape: bf16[64,16], index: 1, kind: input, shape index: {}]
  %s2 = inlined_call_operand.vmem [shape: f32[64,1], index: 2, kind: input, shape index: {}]
  %s3 = inlined_call_operand.hbm [shape: bf16[2,64,64], index: 3, kind: output, shape index: {}]
  %s4 = sld [smem:[#allocation0]]
  $region45: #{tpu_custom_call.1} parent=0
    _
  %s6 = ssub.s32 1, %s4
  %s7 = scalar_select 0, %s6, %s4
  $region1: #{tpu_custom_call.1} parent=0
    #allocation2 [shape = 'u8[32768]{0}', space=vmem, size = 0x8000, scoped, tag = 'output window, operand 0']
    #allocation3 [shape = 's32[2]{0}', space=sflag, size = 0x8, scoped, tag = 'scoped memory for tpu_custom_call.1']
    %8 = vsyncpa [#allocation3], 0
    %s9 = scalar_lea.sflag [#allocation3], 1
    %10 = vsyncpa %s9, 0
    loop: start=0, step=1, limit=4
    $region2: #{tpu_custom_call.1} parent=1 // loop_pre_header
      _
    $region3: #{tpu_custom_call.1} parent=1 // loop_header
      %s12 = sphi 0, %s16
      %p13 = scmp.ge.s32.totalorder %s12, 4
      %s22 = sphi 0, %s24
      %s25 = sphi 0, %s22
      %s26 = sphi 0, %s25
      %s42 = sphi 0, %s26
      %s46 = sphi 0, %s46
      %s48 = sphi 0, %s46
      %s49 = sphi 0, %s48
      %s63 = sphi 0, %s49
      %s67 = sphi 0, %s67
      %s69 = sphi 0, %s67
      %s70 = sphi 0, %s69
      %s84 = sphi 0, %s70
      %s90 = sphi 0, %s92
      %s93 = sphi 0, %s90
      %s94 = sphi 0, %s93
      %s110 = sphi 0, %s94
    $region4: #{tpu_custom_call.1} parent=1 // loop_header_branch
      %15 = sbr.rel (%p13) target = $region8
    $region5: #{tpu_custom_call.1} parent=1 // loop_body
      %s17 = ssub.s32 %s12, 1
      %s18 = ssub.s32 %s12, 2
      %s19 = sadd.s32 %s12, 1
      %s20 = ssub.s32 %s12, %s19
      %p21 = scmp.eq.s32.totalorder %s20, 0
      %s23 = sadd.s32 %s22, 1
      %s24 = scalar_select %p21, %s22, %s23
      %p27 = pneg %p21
      %p28 = scmp.eq.s32.totalorder %s12, 1
      %p29 = por %p27, %p28
      %p30 = scmp.ne.s32.totalorder %s22, %s25
      %p31 = scmp.eq.s32.totalorder %s12, 0
      %p32 = por %p30, %p31
      %p33 = scmp.ne.s32.totalorder %s22, %s25
      %p34 = scmp.eq.s32.totalorder %s17, 1
      %p35 = por %p33, %p34
      %p36 = scmp.ne.s32.totalorder %s25, %s26
      %p37 = scmp.eq.s32.totalorder %s17, 0
      %p38 = por %p36, %p37
      %p39 = scmp.ne.s32.totalorder %s25, %s26
      %p40 = scmp.eq.s32.totalorder %s18, 1
      %p41 = por %p39, %p40
      %p43 = scmp.ne.s32.totalorder %s26, %s42
      %p44 = scmp.eq.s32.totalorder %s18, 0
      %p45 = por %p43, %p44
      %s47 = sadd.s32 %s46, 1
      %p50 = scmp.eq.s32.totalorder %s12, 1
      %p51 = scmp.ne.s32.totalorder %s46, %s48
      %p52 = scmp.eq.s32.totalorder %s12, 0
      %p53 = por %p51, %p52
      %p54 = scmp.ne.s32.totalorder %s46, %s48
      %p55 = scmp.eq.s32.totalorder %s17, 1
      %p56 = por %p54, %p55
      %p57 = scmp.ne.s32.totalorder %s48, %s49
      %p58 = scmp.eq.s32.totalorder %s17, 0
      %p59 = por %p57, %p58
      %p60 = scmp.ne.s32.totalorder %s48, %s49
      %p61 = scmp.eq.s32.totalorder %s18, 1
      %p62 = por %p60, %p61
      %p64 = scmp.ne.s32.totalorder %s49, %s63
      %p65 = scmp.eq.s32.totalorder %s18, 0
      %p66 = por %p64, %p65
      %s68 = sadd.s32 %s67, 1
      %p71 = scmp.eq.s32.totalorder %s12, 1
      %p72 = scmp.ne.s32.totalorder %s67, %s69
      %p73 = scmp.eq.s32.totalorder %s12, 0
      %p74 = por %p72, %p73
      %p75 = scmp.ne.s32.totalorder %s67, %s69
      %p76 = scmp.eq.s32.totalorder %s17, 1
      %p77 = por %p75, %p76
      %p78 = scmp.ne.s32.totalorder %s69, %s70
      %p79 = scmp.eq.s32.totalorder %s17, 0
      %p80 = por %p78, %p79
      %p81 = scmp.ne.s32.totalorder %s69, %s70
      %p82 = scmp.eq.s32.totalorder %s18, 1
      %p83 = por %p81, %p82
      %p85 = scmp.ne.s32.totalorder %s70, %s84
      %p86 = scmp.eq.s32.totalorder %s18, 0
      %p87 = por %p85, %p86
      %s88 = ssub.s32 %s12, %s19
      %p89 = scmp.eq.s32.totalorder %s88, 0
      %s91 = sadd.s32 %s90, 1
      %s92 = scalar_select %p89, %s90, %s91
      %p95 = pneg %p89
      %p96 = scmp.eq.s32.totalorder %s12, 1
      %p97 = por %p95, %p96
      %p98 = scmp.ne.s32.totalorder %s90, %s93
      %p99 = scmp.eq.s32.totalorder %s12, 0
      %p100 = por %p98, %p99
      %p101 = scmp.ne.s32.totalorder %s90, %s93
      %p102 = scmp.eq.s32.totalorder %s17, 1
      %p103 = por %p101, %p102
      %p104 = scmp.ne.s32.totalorder %s93, %s94
      %p105 = scmp.eq.s32.totalorder %s17, 0
      %p106 = por %p104, %p105
      %p107 = scmp.ne.s32.totalorder %s93, %s94
      %p108 = scmp.eq.s32.totalorder %s18, 1
      %p109 = por %p107, %p108
      %p111 = scmp.ne.s32.totalorder %s94, %s110
      %p112 = scmp.eq.s32.totalorder %s18, 0
      %p113 = por %p111, %p112
      %p114 = scmp.le.s32.totalorder 1, %s12
      %p115 = scmp.lt.s32.totalorder %s12, 3
      %p116 = pnand %p114, %p115
      %p117 = pneg %p116
      // Predicated region
      $region9: #{tpu_custom_call.1} parent=5 // pred_check
        _
      $region10: #{tpu_custom_call.1} parent=5 // pred_check_branch
        %119 = sbr.rel (%p116) target = $region12
      $region11: #{tpu_custom_call.1} parent=5 // pred_region
        %s120 = ssub.s32 %s12, 1
        // Predicated region
        $region13: #{tpu_custom_call.1} parent=11 // pred_check
          %p121 = pneg %p59
        $region14: #{tpu_custom_call.1} parent=11 // pred_check_branch
          %123 = sbr.rel (%p121) target = $region16
        $region15: #{tpu_custom_call.1} parent=11 // pred_region
          _
        $region16: #{tpu_custom_call.1} parent=11 // pred_fallthru
          _
        // Predicated region
        $region17: #{tpu_custom_call.1} parent=11 // pred_check
          %p124 = pneg %p80
        $region18: #{tpu_custom_call.1} parent=11 // pred_check_branch
          %126 = sbr.rel (%p124) target = $region20
        $region19: #{tpu_custom_call.1} parent=11 // pred_region
          _
        $region20: #{tpu_custom_call.1} parent=11 // pred_fallthru
          _
      $region12: #{tpu_custom_call.1} parent=5 // pred_fallthru
        _
      %p127 = scmp.lt.s32.totalorder %s12, 2
      // Predicated region
      $region21: #{tpu_custom_call.1} parent=5 // pred_check
        %p128 = pneg %p127
      $region22: #{tpu_custom_call.1} parent=5 // pred_check_branch
        %130 = sbr.rel (%p128) target = $region24
      $region23: #{tpu_custom_call.1} parent=5 // pred_region
        // Predicated region
        $region25: #{tpu_custom_call.1} parent=23 // pred_check
          %p131 = pneg %p32
        $region26: #{tpu_custom_call.1} parent=23 // pred_check_branch
          %133 = sbr.rel (%p131) target = $region28
        $region27: #{tpu_custom_call.1} parent=23 // pred_region
          %p134 = scmp.lt.s32.totalorder %s12, 1
          %s135 = scalar_select %p134, %s12, 1
          %s136 = smul.addr %s135, 2
          %s137 = smul.addr %s136, 4
          %s138 = scalar_lea.vmem %s0, %s137
        $region28: #{tpu_custom_call.1} parent=23 // pred_fallthru
          _
      $region24: #{tpu_custom_call.1} parent=5 // pred_fallthru
        _
      %p139 = scmp.le.s32.totalorder 1, %s12
      %p140 = scmp.lt.s32.totalorder %s12, 3
      %p141 = pnand %p139, %p140
      %p142 = pneg %p141
      // Predicated region
      $region29: #{tpu_custom_call.1} parent=5 // pred_check
        _
      $region30: #{tpu_custom_call.1} parent=5 // pred_check_branch
        %144 = sbr.rel (%p141) target = $region32
      $region31: #{tpu_custom_call.1} parent=5 // pred_region
        %s145 = ssub.s32 %s12, 1
        %p146 = scmp.lt.s32.totalorder %s17, 1
        %s147 = scalar_select %p146, %s17, 1
        %s148 = smul.addr %s147, 2
        %s149 = smul.addr %s148, 4
        %s150 = scalar_lea.vmem %s0, %s149
        %p151 = pneg %p38
        %p152 = pneg %p35
        %p153 = pneg %p59
        %p154 = pneg %p56
        %p155 = pneg %p80
        %p156 = pneg %p77
        %p157 = pneg %p106
        %p158 = pneg %p103
        %s159 = sand.u32 %s93, 1
        %s160 = scalar_lea.sflag [#allocation3], %s159
        %s161 = sand.u32 %s93, 1
        %s162 = smul.addr %s161, 32
        %s163 = scalar_lea.vmem [#allocation2], %s162
        %p164 = scmp.lt.s32.totalorder %s17, 1
        %s165 = scalar_select %p164, %s17, 1
        %s166 = smul.addr %s165, 2
        %s167 = smul.addr %s166, 4
        %s168 = scalar_lea.vmem %s0, %s167
        %v170 = vld [vmem:[%s1] sm:$0xf]
        %v171 = vld [vmem:[%s1 + $0x4] sm:$0xf]
        %v172 = vld [vmem:[%s1 + $0x8] sm:$0xf]
        %v173 = vld [vmem:[%s1 + $0xc] sm:$0xf]
        %v174 = vld [vmem:[%s1 + $0x10] sm:$0xf]
        %v175 = vld [vmem:[%s1 + $0x14] sm:$0xf]
        %v176 = vld [vmem:[%s1 + $0x18] sm:$0xf]
        %v177 = vld [vmem:[%s1 + $0x1c] sm:$0xf]
        %v178 = vld [vmem:[%s168] sm:$0xf]
        %v179 = vld [vmem:[%s168 + $0x4] sm:$0xf]
        %v180 = vld [vmem:[%s2] sm:$0xff]
        %v181 = vld [vmem:[%s2 + $0x8] sm:$0xff]
        %v182 = vld [vmem:[%s2 + $0x10] sm:$0xff]
        %v183 = vld [vmem:[%s2 + $0x18] sm:$0xff]
        %v184 = vld [vmem:[%s2 + $0x20] sm:$0xff]
        %v185 = vld [vmem:[%s2 + $0x28] sm:$0xff]
        %v186 = vld [vmem:[%s2 + $0x30] sm:$0xff]
        %v187 = vld [vmem:[%s2 + $0x38] sm:$0xff]
        %189 = vset.pattern.permute.xlu0 0
        %190 = vperm.xlu0 %189, %v180
        %v191 = vpop.permute.xlu0 %190
        %194 = vset.pattern.permute.xlu0 0
        %195 = vperm.xlu0 %194, %v181
        %v196 = vpop.permute.xlu0 %195
        %199 = vset.pattern.permute.xlu0 0
        %200 = vperm.xlu0 %199, %v182
        %v201 = vpop.permute.xlu0 %200
        %204 = vset.pattern.permute.xlu0 0
        %205 = vperm.xlu0 %204, %v183
        %v206 = vpop.permute.xlu0 %205
        %209 = vset.pattern.permute.xlu0 0
        %210 = vperm.xlu0 %209, %v184
        %v211 = vpop.permute.xlu0 %210
        %214 = vset.pattern.permute.xlu0 0
        %215 = vperm.xlu0 %214, %v185
        %v216 = vpop.permute.xlu0 %215
        %219 = vset.pattern.permute.xlu0 0
        %220 = vperm.xlu0 %219, %v186
        %v221 = vpop.permute.xlu0 %220
        %224 = vset.pattern.permute.xlu0 0
        %225 = vperm.xlu0 %224, %v187
        %v226 = vpop.permute.xlu0 %225
        %v236 = vunpack.c.l.b16 %v170
        %v237 = vunpack.c.l.b16 %v171
        %v238 = vunpack.c.l.b16 %v172
        %v239 = vunpack.c.l.b16 %v173
        %v240 = vunpack.c.l.b16 %v174
        %v241 = vunpack.c.l.b16 %v175
        %v242 = vunpack.c.l.b16 %v176
        %v243 = vunpack.c.l.b16 %v177
        %v244 = vpack.c.b16 %v237, %v236
        %v245 = vpack.c.b16 %v239, %v238
        %v246 = vpack.c.b16 %v241, %v240
        %v247 = vpack.c.b16 %v243, %v242
        %v250 = vunpack.c.l.b16 %v178
        %v251 = vunpack.c.l.b16 %v179
        %v252 = vpack.c.b16 %v251, %v250
        %vm254 = vcmask 130048
        %v256 = vsel %vm254, %v244, 0
        %v259 = vsel %vm254, %v245, 0
        %v262 = vsel %vm254, %v246, 0
        %v265 = vsel %vm254, %v247, 0
        %267 = vmatprep.subr.bf16.mxu0 0
        %268 = vmatpush1.bf16.msra.mxu0 0
        %269 = vmatprep.subr.bf16.mxu0 0
        %270 = vmatpush1.bf16.msra.mxu0 0
        %271 = vmatprep.subr.bf16.mxu0 0
        %272 = vmatpush1.bf16.msra.mxu0 0
        %273 = vmatprep.subr.bf16.mxu0 0
        %274 = vmatpush1.bf16.msra.mxu0 0
        %275 = vmatprep.subr.bf16.mxu0 0
        %276 = vmatpush1.bf16.msra.mxu0 0
        %277 = vmatprep.subr.bf16.mxu0 0
        %278 = vmatpush1.bf16.msra.mxu0 0
        %279 = vmatprep.subr.bf16.mxu0 0
        %280 = vmatpush1.bf16.msra.mxu0 0
        %281 = vmatprep.subr.bf16.mxu0 0
        %282 = vmatpush1.bf16.msra.mxu0 %v252
        %283 = vmatprep.subr.bf16.mxu0 0
        %284 = vmatpush2.bf16.msra.mxu0 0
        %285 = vmatprep.subr.bf16.mxu0 0
        %286 = vmatpush2.bf16.msra.mxu0 0
        %287 = vmatprep.subr.bf16.mxu0 0
        %288 = vmatpush2.bf16.msra.mxu0 0
        %289 = vmatprep.subr.bf16.mxu0 0
        %290 = vmatpush2.bf16.msra.mxu0 0
        %291 = vmatprep.subr.bf16.mxu0 0
        %292 = vmatpush2.bf16.msra.mxu0 0
        %293 = vmatprep.subr.bf16.mxu0 0
        %294 = vmatpush2.bf16.msra.mxu0 0
        %295 = vmatprep.subr.bf16.mxu0 0
        %296 = vmatpush2.bf16.msra.mxu0 0
        %297 = vmatprep.subr.bf16.mxu0 0
        %298 = vmatpush2.bf16.msra.mxu0 0
        %299 = vmatprep.mubr.bf16.mxu0 0
        %300 = vmatmul.mubr.bf16.gmra.mxu0 %v256
        %v301 = vpop.f32.mrf.mxu0
        %v302 = vadd.f32 %v191, %v301
        %v303 = vpop.f32.mrf.mxu0
        %v304 = vpop.f32.mrf.mxu0
        %v305 = vadd.f32 %v196, %v304
        %v306 = vpop.f32.mrf.mxu0
        %307 = vmatprep.mubr.bf16.mxu0 0
        %308 = vmatmul.mubr.bf16.gmra.mxu0 %v259
        %v309 = vpop.f32.mrf.mxu0
        %v310 = vadd.f32 %v201, %v309
        %v311 = vpop.f32.mrf.mxu0
        %v312 = vpop.f32.mrf.mxu0
        %v313 = vadd.f32 %v206, %v312
        %v314 = vpop.f32.mrf.mxu0
        %315 = vmatprep.mubr.bf16.mxu0 0
        %316 = vmatmul.mubr.bf16.gmra.mxu0 %v262
        %v317 = vpop.f32.mrf.mxu0
        %v318 = vadd.f32 %v211, %v317
        %v319 = vpop.f32.mrf.mxu0
        %v320 = vpop.f32.mrf.mxu0
        %v321 = vadd.f32 %v216, %v320
        %v322 = vpop.f32.mrf.mxu0
        %323 = vmatprep.mubr.bf16.mxu0 0
        %324 = vmatmul.mubr.bf16.gmra.mxu0 %v265
        %v325 = vpop.f32.mrf.mxu0
        %v326 = vadd.f32 %v221, %v325
        %v327 = vpop.f32.mrf.mxu0
        %v328 = vpop.f32.mrf.mxu0
        %v329 = vadd.f32 %v226, %v328
        %v330 = vpop.f32.mrf.mxu0
        %331 = vdwg.mxu0
        %v332 = vpack.c.bf16 %v305, %v302
        %v333 = vpack.c.bf16 %v313, %v310
        %v334 = vpack.c.bf16 %v321, %v318
        %v335 = vpack.c.bf16 %v329, %v326
        %v340 = vunpack.c.l.b16 %v332
        %v341 = vunpack.c.h.b16 %v332
        %v342 = vunpack.c.l.b16 %v333
        %v343 = vunpack.c.h.b16 %v333
        %v344 = vunpack.c.l.b16 %v334
        %v345 = vunpack.c.h.b16 %v334
        %v346 = vunpack.c.l.b16 %v335
        %v347 = vunpack.c.h.b16 %v335
        %v348 = vpack.c.b16 %v340, %v340
        %v349 = vpack.c.b16 %v341, %v341
        %v350 = vpack.c.b16 %v342, %v342
        %v351 = vpack.c.b16 %v343, %v343
        %v352 = vpack.c.b16 %v344, %v344
        %v353 = vpack.c.b16 %v345, %v345
        %v354 = vpack.c.b16 %v346, %v346
        %v355 = vpack.c.b16 %v347, %v347
        %vm364 = vcmask 519168
        %365 = vst.msk [vmem:[%s163] sm:$0xf] %vm364, %v348
        %366 = vst.msk [vmem:[%s163 + $0x4] sm:$0xf] %vm364, %v349
        %367 = vst.msk [vmem:[%s163 + $0x8] sm:$0xf] %vm364, %v350
        %368 = vst.msk [vmem:[%s163 + $0xc] sm:$0xf] %vm364, %v351
        %369 = vst.msk [vmem:[%s163 + $0x10] sm:$0xf] %vm364, %v352
        %370 = vst.msk [vmem:[%s163 + $0x14] sm:$0xf] %vm364, %v353
        %371 = vst.msk [vmem:[%s163 + $0x18] sm:$0xf] %vm364, %v354
        %372 = vst.msk [vmem:[%s163 + $0x1c] sm:$0xf] %vm364, %v355
        %s373 = sand.u32 %s93, 1
        %s374 = scalar_lea.sflag [#allocation3], %s373
        %s375 = sand.u32 %s93, 1
        %s376 = smul.addr %s375, 32
        %s377 = scalar_lea.vmem [#allocation2], %s376
        // Predicated region
        $region33: #{tpu_custom_call.1} parent=31 // pred_check
          %p378 = pneg %p103
        $region34: #{tpu_custom_call.1} parent=31 // pred_check_branch
          %380 = sbr.rel (%p378) target = $region36
        $region35: #{tpu_custom_call.1} parent=31 // pred_region
          %s382 = ssub.s32 512, 512
          %383 = vsyncadd %s374, %s382
          %s384 = smul.addr %s17, 8
          %s385 = smul.addr %s384, 64
          %s386 = scalar_lea.hbm %s3, %s385
          %s387 = sshll.u32 %s377, 4
          %s388 = int_to_ptr.vmem [resolvable:$true] %s387
          %393 = dma.vmem_to_hbm [thread:$0]  %s388, 512, %s386, %s374, 64, 64, 4
        $region36: #{tpu_custom_call.1} parent=31 // pred_fallthru
          _
      $region32: #{tpu_custom_call.1} parent=5 // pred_fallthru
        _
      %p394 = scmp.le.s32.totalorder 2, %s12
      // Predicated region
      $region37: #{tpu_custom_call.1} parent=5 // pred_check
        %p395 = pneg %p394
      $region38: #{tpu_custom_call.1} parent=5 // pred_check_branch
        %397 = sbr.rel (%p395) target = $region40
      $region39: #{tpu_custom_call.1} parent=5 // pred_region
        %s398 = ssub.s32 %s12, 2
        // Predicated region
        $region41: #{tpu_custom_call.1} parent=39 // pred_check
          %p399 = pneg %p109
        $region42: #{tpu_custom_call.1} parent=39 // pred_check_branch
          %401 = sbr.rel (%p399) target = $region44
        $region43: #{tpu_custom_call.1} parent=39 // pred_region
          %s402 = sand.u32 %s94, 1
          %s403 = scalar_lea.sflag [#allocation3], %s402
          %s404 = sand.u32 %s94, 1
          %s405 = smul.addr %s404, 32
          %s406 = scalar_lea.vmem [#allocation2], %s405
          %407 = dma.done %s403, 512
        $region44: #{tpu_custom_call.1} parent=39 // pred_fallthru
          _
      $region40: #{tpu_custom_call.1} parent=5 // pred_fallthru
        _
    $region6: #{tpu_custom_call.1} parent=1 // loop_footer
      %s16 = sadd.s32 1, %s12
    $region7: #{tpu_custom_call.1} parent=1 // loop_footer_branch
      %11 = sbr.rel target = $region3
    $region8: #{tpu_custom_call.1} parent=1 // loop_exit
      _
    %408 = vsyncpa [#allocation3], 1
    %s409 = scalar_lea.sflag [#allocation3], 1
    %410 = vsyncpa %s409, 1

</llo_original>
